<compile_context>
chip_gen: v7x
topology: tpu7x:2x2x1
jax: 0.10.0
libtpu: 0.0.40
codegen_flags: <defaults>
</compile_context>

<pallas_src>
import jax
import jax.numpy as jnp
from jax.experimental import pallas as pl
from jax.experimental.pallas import tpu as pltpu

LANE = 128
# Bias fill for padded output classes.  Exact in the f32 epilogue: the row max is a
# real logit, so exp(NEG_INF - max) underflows to exactly 0 in the normalizer.
# NOTE: this relies on the log-softmax staying f32 and real logits being >> -1e30.
NEG_INF = -1e30


def _round_up(n, m=LANE):
    return ((n + m - 1) // m) * m


# ---------------------------------------------------------------------------
# Kernel: one grid step = one group of G Monte-Carlo samples, fully resident.
# ---------------------------------------------------------------------------
def classifier_bbb_kernel(x_ref, w1_ref, w23_ref, b_ref, o_ref):
    G = o_ref.shape[0]
    hid_p = b_ref.shape[-1]

    x = x_ref[...]  # [B, in_p] bf16 (pre-cast on host, resident across the grid)

    # Layer 1 fused across the group's samples: one wide MXU matmul
    # [B, in_p] x [in_p, G*hid_p] -> [B, G*hid_p], f32 accumulation.
    h1_all = jnp.dot(x, w1_ref[0], preferred_element_type=jnp.float32)

    # Per-sample layers 2/3 + log-softmax (G is tiny and static -> unrolled).
    for g in range(G):
        h1 = jax.nn.sigmoid(h1_all[:, g * hid_p:(g + 1) * hid_p] + b_ref[0, g, 0:1, :])

        w2 = w23_ref[0, g, :, :hid_p]   # [hid_p, hid_p] bf16
        w3 = w23_ref[0, g, :, hid_p:]   # [hid_p, out_p] bf16 (out_p == hid_p here)

        h2 = jax.nn.sigmoid(
            jnp.dot(h1.astype(jnp.bfloat16), w2, preferred_element_type=jnp.float32)
            + b_ref[0, g, 1:2, :])

        logits = (jnp.dot(h2.astype(jnp.bfloat16), w3,
                          preferred_element_type=jnp.float32)
                  + b_ref[0, g, 2:3, :])

        # log_softmax over the (lane-padded) class axis; padded classes carry a
        # NEG_INF bias and zero weights -> exactly 0 contribution to the sum.
        m = jnp.max(logits, axis=-1, keepdims=True)
        shifted = logits - m
        lse = jnp.log(jnp.sum(jnp.exp(shifted), axis=-1, keepdims=True))
        o_ref[g] = (shifted - lse).astype(o_ref.dtype)


# ---------------------------------------------------------------------------
# Wrapper: grid over sample groups (2 groups when S is even -> v7x megacore).
# ---------------------------------------------------------------------------
def classifier_bbb_forward(x_pad, w1_fused, w23, biases):
    """x_pad:    [B, in_p]                 bf16 (lane-padded inputs, shared by all samples)
       w1_fused: [NG, in_p, G*hid_p]       bf16 (layer-1 weights, samples fused along columns)
       w23:      [NG, G, hid_p, hid_p+out_p] bf16 (layer-2 | layer-3 weights concatenated)
       biases:   [NG, G, 3, hid_p]         f32  (b1, b2, b3; b3 padded with NEG_INF)
       Returns log-probs [S, B, out_p] f32 (slice real classes outside)."""
    NG, in_p, g_hid = w1_fused.shape
    _, G, hid_p, w23_cols = w23.shape
    out_p = w23_cols - hid_p
    B = x_pad.shape[0]
    S = NG * G

    flops = 2 * S * B * (in_p * hid_p + hid_p * hid_p + hid_p * out_p)
    transcendentals = S * B * (2 * hid_p + out_p)
    bytes_accessed = (sum(int(a.size) * a.dtype.itemsize
                          for a in (x_pad, w1_fused, w23, biases))
                      + S * B * out_p * 4)

    return pl.pallas_call(
        classifier_bbb_kernel,
        out_shape=jax.ShapeDtypeStruct((S, B, out_p), jnp.float32),
        grid_spec=pltpu.PrefetchScalarGridSpec(
            num_scalar_prefetch=0,
            grid=(NG,),
            in_specs=[
                # x: VMEM-resident across the whole grid (constant block index).
                pl.BlockSpec((B, in_p), lambda i: (0, 0)),
                # Per-group weight / bias slabs (3 DMAs per step instead of 6).
                pl.BlockSpec((1, in_p, g_hid), lambda i: (i, 0, 0)),
                pl.BlockSpec((1, G, hid_p, w23_cols), lambda i: (i, 0, 0, 0)),
                pl.BlockSpec((1, G, 3, hid_p), lambda i: (i, 0, 0, 0)),
            ],
            out_specs=pl.BlockSpec((G, B, out_p), lambda i: (i, 0, 0)),
        ),
        compiler_params=pltpu.CompilerParams(
            # Sample groups are independent -> 2 groups feed both TCs on v7x;
            # a no-op extra step on v5e/v6e.
            dimension_semantics=("parallel",),
            # Resident-weight budget: S*3*128*128*2B ~= 384 KiB at S=4 — far under
            # the 32 MiB scoped / 64 MiB physical VMEM on v7x; re-derive if S or the
            # hidden width is scaled up (v7x hits the ceiling 2x sooner than v6e).
            vmem_limit_bytes=32 * 1024 * 1024,
        ),
        cost_estimate=pl.CostEstimate(
            flops=flops, transcendentals=transcendentals,
            bytes_accessed=bytes_accessed),
    )(x_pad, w1_fused, w23, biases)


# ---------------------------------------------------------------------------
# Host-side glue: Gaussian reparameterization + lane padding + slab packing.
# ---------------------------------------------------------------------------
def sample_bbb_layer(w_mu, w_rho, b_mu, b_rho, key):
    """One reparameterized draw, PyTorch layout: w [out, in], b [out]."""
    kw, kb = jax.random.split(key)
    w = w_mu + jax.nn.softplus(w_rho) * jax.random.normal(kw, w_mu.shape, jnp.float32)
    b = b_mu + jax.nn.softplus(b_rho) * jax.random.normal(kb, b_mu.shape, jnp.float32)
    return w, b


def _pad_wt(w, in_p, out_p):
    """[S, out_f, in_f] (PyTorch layout) -> padded, transposed [S, in_p, out_p] f32."""
    s, out_f, in_f = w.shape
    wt = jnp.transpose(w, (0, 2, 1))
    return jnp.zeros((s, in_p, out_p), jnp.float32).at[:, :in_f, :out_f].set(wt)


def _pad_b(b, width, fill=0.0):
    s, n = b.shape
    return jnp.full((s, width), fill, jnp.float32).at[:, :n].set(b)


def pack_params_for_kernel(w1_s, b1_s, w2_s, b2_s, w3_s, b3_s,
                           in_p, hid_p, out_p, num_groups):
    """Pack S sampled parameter sets into per-group kernel slabs."""
    assert hid_p == out_p, "bias slab packing assumes hid_p == out_p (both 128 here)"
    S = w1_s.shape[0]
    assert S % num_groups == 0
    G = S // num_groups

    w1p = _pad_wt(w1_s, in_p, hid_p)    # [S, in_p, hid_p]
    w2p = _pad_wt(w2_s, hid_p, hid_p)   # [S, hid_p, hid_p]
    w3p = _pad_wt(w3_s, hid_p, out_p)   # [S, hid_p, out_p]

    # Layer-1 fused slab: samples of a group concatenated along output columns.
    w1_fused = (w1p.reshape(num_groups, G, in_p, hid_p)
                   .transpose(0, 2, 1, 3)
                   .reshape(num_groups, in_p, G * hid_p)
                   .astype(jnp.bfloat16))

    # Layers 2+3 slab: columns concatenated -> [NG, G, hid_p, hid_p + out_p].
    w23 = (jnp.concatenate([w2p, w3p], axis=-1)
              .reshape(num_groups, G, hid_p, hid_p + out_p)
              .astype(jnp.bfloat16))

    # Bias slab: [NG, G, 3, hid_p]; output bias padded with NEG_INF.
    b1p = _pad_b(b1_s, hid_p)
    b2p = _pad_b(b2_s, hid_p)
    b3p = _pad_b(b3_s, out_p, fill=NEG_INF)
    biases = jnp.stack([b1p, b2p, b3p], axis=1).reshape(num_groups, G, 3, hid_p)

    return w1_fused, w23, biases


if __name__ == "__main__":
    # Small shapes consistent with the module.
    in_dim, hidden_dim, out_dim = 16, 32, 8
    batch, samples = 8, 4          # `samples` = sample_elbo's Monte-Carlo forward passes
    num_groups = 2 if samples % 2 == 0 else 1   # 2 groups -> both TCs on v7x

    in_p, hid_p, out_p = _round_up(in_dim), _round_up(hidden_dim), _round_up(out_dim)

    root = jax.random.PRNGKey(0)
    k_x, k_p1, k_p2, k_p3, k_samp = jax.random.split(root, 5)

    x = jax.random.normal(k_x, (batch, in_dim), jnp.float32)

    def init_layer(key, n_in, n_out):
        k_w, k_b = jax.random.split(key)
        w_mu = 0.1 * jax.random.normal(k_w, (n_out, n_in), jnp.float32)
        w_rho = jnp.full((n_out, n_in), -4.0, jnp.float32)
        b_mu = 0.1 * jax.random.normal(k_b, (n_out,), jnp.float32)
        b_rho = jnp.full((n_out,), -4.0, jnp.float32)
        return w_mu, w_rho, b_mu, b_rho

    p1 = init_layer(k_p1, in_dim, hidden_dim)
    p2 = init_layer(k_p2, hidden_dim, hidden_dim)
    p3 = init_layer(k_p3, hidden_dim, out_dim)

    # One reparameterized weight draw per Monte-Carlo sample (sample_elbo's loop),
    # vmapped and materialized once; the kernel consumes them as resident slabs.
    keys = jax.random.split(k_samp, samples * 3)
    w1_s, b1_s = jax.vmap(lambda k: sample_bbb_layer(*p1, k))(keys[0::3])
    w2_s, b2_s = jax.vmap(lambda k: sample_bbb_layer(*p2, k))(keys[1::3])
    w3_s, b3_s = jax.vmap(lambda k: sample_bbb_layer(*p3, k))(keys[2::3])

    w1_k, w23_k, b_k = pack_params_for_kernel(
        w1_s, b1_s, w2_s, b2_s, w3_s, b3_s, in_p, hid_p, out_p, num_groups)

    # Inputs: lane-pad and pre-cast to bf16 once on the host.
    x_pad = (jnp.zeros((batch, in_p), jnp.float32).at[:, :in_dim].set(x)
             ).astype(jnp.bfloat16)

    out_padded = classifier_bbb_forward(x_pad, w1_k, w23_k, b_k)
    out_padded = jax.block_until_ready(out_padded)
    out = out_padded[:, :, :out_dim]  # [S, B, out_dim] log-probabilities

    # Reference in plain JAX on the UNPADDED sampled params (same bf16 matmul dtype).
    def ref_forward(xb, w1, b1, w2, b2, w3, b3):
        bf = jnp.bfloat16
        h1 = jax.nn.sigmoid(jnp.dot(xb.astype(bf), w1.T.astype(bf),
                                    preferred_element_type=jnp.float32) + b1)
        h2 = jax.nn.sigmoid(jnp.dot(h1.astype(bf), w2.T.astype(bf),
                                    preferred_element_type=jnp.float32) + b2)
        logits = jnp.dot(h2.astype(bf), w3.T.astype(bf),
                         preferred_element_type=jnp.float32) + b3
        return jax.nn.log_softmax(logits, axis=1)

    ref = jax.vmap(
        lambda w1, b1, w2, b2, w3, b3: ref_forward(x, w1, b1, w2, b2, w3, b3)
    )(w1_s, b1_s, w2_s, b2_s, w3_s, b3_s)

    assert out.shape == (samples, batch, out_dim)
    assert jnp.allclose(out, ref, atol=1e-3, rtol=1e-3), float(jnp.max(jnp.abs(out - ref)))

    # TODO(synk): log_prior / log_post / log_like and the ELBO loss aggregation are
    # training-time scalar reductions over parameters/outputs, kept outside the kernel.
    print("KERNEL_OK")
</pallas_src>

<mosaic_0001>
module attributes {stable_mosaic.version = 11 : i64} {
  func.func @classifier_bbb_kernel(%arg0: i32, %arg1: memref<8x128xbf16, #tpu.memory_space<vmem>>, %arg2: memref<1x128x256xbf16, #tpu.memory_space<vmem>>, %arg3: memref<1x2x128x256xbf16, #tpu.memory_space<vmem>>, %arg4: memref<1x2x3x128xf32, #tpu.memory_space<vmem>>, %arg5: memref<2x8x128xf32, #tpu.memory_space<vmem>>) attributes {dimension_semantics = [#tpu.dimension_semantics<parallel>], iteration_bounds = array<i64: 2>, scalar_prefetch = 0 : i64, scratch_operands = 0 : i64, tpu.core_type = #tpu.core_type<tc>, window_params = [{pipeline_mode = #tpu.pipeline_mode<synchronous>, transform_indices = @transform_0, window_bounds = array<i64: 8, 128>}, {transform_indices = @transform_1, window_bounds = array<i64: 1, 128, 256>}, {transform_indices = @transform_2, window_bounds = array<i64: 1, 2, 128, 256>}, {transform_indices = @transform_3, window_bounds = array<i64: 1, 2, 3, 128>}, {transform_indices = @transform_4, window_bounds = array<i64: 2, 8, 128>}]} {
    %c0 = arith.constant 0 : index
    %c0_0 = arith.constant 0 : index
    %0 = vector.load %arg1[%c0, %c0_0] : memref<8x128xbf16, #tpu.memory_space<vmem>>, vector<8x128xbf16>
    %c0_1 = arith.constant 0 : index
    %c0_2 = arith.constant 0 : index
    %c0_3 = arith.constant 0 : index
    %1 = vector.load %arg2[%c0_1, %c0_2, %c0_3] : memref<1x128x256xbf16, #tpu.memory_space<vmem>>, vector<1x128x256xbf16>
    %2 = vector.shape_cast %1 : vector<1x128x256xbf16> to vector<128x256xbf16>
    %cst = arith.constant dense<0.000000e+00> : vector<8x256xf32>
    %3 = tpu.matmul %0, %2, %cst {dimension_numbers = #tpu.dot_dimension_numbers<[1], [0], [0], [1], [0, 0, 1, 1], [], []>} : vector<8x128xbf16>, vector<128x256xbf16>, vector<8x256xf32> -> vector<8x256xf32>
    %4 = vector.extract_strided_slice %3 {offsets = [0, 0], sizes = [8, 128], strides = [1, 1]} : vector<8x256xf32> to vector<8x128xf32>
    %c0_4 = arith.constant 0 : index
    %c0_5 = arith.constant 0 : index
    %c0_6 = arith.constant 0 : index
    %c0_7 = arith.constant 0 : index
    %5 = vector.load %arg4[%c0_4, %c0_5, %c0_6, %c0_7] : memref<1x2x3x128xf32, #tpu.memory_space<vmem>>, vector<1x1x1x128xf32>
    %6 = vector.shape_cast %5 : vector<1x1x1x128xf32> to vector<1x128xf32>
    %7 = vector.broadcast %6 : vector<1x128xf32> to vector<8x128xf32>
    %8 = arith.addf %4, %7 : vector<8x128xf32>
    %9 = arith.negf %8 : vector<8x128xf32>
    %10 = math.exp %9 : vector<8x128xf32>
    %cst_8 = arith.constant 1.000000e+00 : f32
    %11 = vector.broadcast %cst_8 : f32 to vector<8x128xf32>
    %12 = arith.addf %11, %10 : vector<8x128xf32>
    %13 = arith.divf %11, %12 : vector<8x128xf32>
    %c0_9 = arith.constant 0 : index
    %c0_10 = arith.constant 0 : index
    %c0_11 = arith.constant 0 : index
    %c0_12 = arith.constant 0 : index
    %14 = vector.load %arg3[%c0_9, %c0_10, %c0_11, %c0_12] : memref<1x2x128x256xbf16, #tpu.memory_space<vmem>>, vector<1x1x128x128xbf16>
    %15 = vector.shape_cast %14 : vector<1x1x128x128xbf16> to vector<128x128xbf16>
    %c0_13 = arith.constant 0 : index
    %c0_14 = arith.constant 0 : index
    %c0_15 = arith.constant 0 : index
    %c128 = arith.constant 128 : index
    %16 = vector.load %arg3[%c0_13, %c0_14, %c0_15, %c128] : memref<1x2x128x256xbf16, #tpu.memory_space<vmem>>, vector<1x1x128x128xbf16>
    %17 = vector.shape_cast %16 : vector<1x1x128x128xbf16> to vector<128x128xbf16>
    %18 = arith.truncf %13 : vector<8x128xf32> to vector<8x128xbf16>
    %cst_16 = arith.constant dense<0.000000e+00> : vector<8x128xf32>
    %19 = tpu.matmul %18, %15, %cst_16 {dimension_numbers = #tpu.dot_dimension_numbers<[1], [0], [0], [1], [0, 0, 1, 1], [], []>} : vector<8x128xbf16>, vector<128x128xbf16>, vector<8x128xf32> -> vector<8x128xf32>
    %c0_17 = arith.constant 0 : index
    %c0_18 = arith.constant 0 : index
    %c1 = arith.constant 1 : index
    %c0_19 = arith.constant 0 : index
    %20 = vector.load %arg4[%c0_17, %c0_18, %c1, %c0_19] : memref<1x2x3x128xf32, #tpu.memory_space<vmem>>, vector<1x1x1x128xf32>
    %21 = vector.shape_cast %20 : vector<1x1x1x128xf32> to vector<1x128xf32>
    %22 = vector.broadcast %21 : vector<1x128xf32> to vector<8x128xf32>
    %23 = arith.addf %19, %22 : vector<8x128xf32>
    %24 = arith.negf %23 : vector<8x128xf32>
    %25 = math.exp %24 : vector<8x128xf32>
    %cst_20 = arith.constant 1.000000e+00 : f32
    %26 = vector.broadcast %cst_20 : f32 to vector<8x128xf32>
    %27 = arith.addf %26, %25 : vector<8x128xf32>
    %28 = arith.divf %26, %27 : vector<8x128xf32>
    %29 = arith.truncf %28 : vector<8x128xf32> to vector<8x128xbf16>
    %cst_21 = arith.constant dense<0.000000e+00> : vector<8x128xf32>
    %30 = tpu.matmul %29, %17, %cst_21 {dimension_numbers = #tpu.dot_dimension_numbers<[1], [0], [0], [1], [0, 0, 1, 1], [], []>} : vector<8x128xbf16>, vector<128x128xbf16>, vector<8x128xf32> -> vector<8x128xf32>
    %c0_22 = arith.constant 0 : index
    %c0_23 = arith.constant 0 : index
    %c2 = arith.constant 2 : index
    %c0_24 = arith.constant 0 : index
    %31 = vector.load %arg4[%c0_22, %c0_23, %c2, %c0_24] : memref<1x2x3x128xf32, #tpu.memory_space<vmem>>, vector<1x1x1x128xf32>
    %32 = vector.shape_cast %31 : vector<1x1x1x128xf32> to vector<1x128xf32>
    %33 = vector.broadcast %32 : vector<1x128xf32> to vector<8x128xf32>
    %34 = arith.addf %30, %33 : vector<8x128xf32>
    %cst_25 = arith.constant dense<0xFF800000> : vector<8xf32>
    %35 = vector.multi_reduction <maximumf>, %34, %cst_25 [1] : vector<8x128xf32> to vector<8xf32>
    %36 = vector.shape_cast %35 : vector<8xf32> to vector<8x1xf32>
    %37 = vector.broadcast %36 : vector<8x1xf32> to vector<8x128xf32>
    %38 = arith.subf %34, %37 : vector<8x128xf32>
    %39 = math.exp %38 : vector<8x128xf32>
    %cst_26 = arith.constant dense<0.000000e+00> : vector<8xf32>
    %40 = vector.multi_reduction <add>, %39, %cst_26 [1] : vector<8x128xf32> to vector<8xf32>
    %41 = vector.shape_cast %40 : vector<8xf32> to vector<8x1xf32>
    %42 = math.log %41 : vector<8x1xf32>
    %43 = vector.broadcast %42 : vector<8x1xf32> to vector<8x128xf32>
    %44 = arith.subf %38, %43 : vector<8x128xf32>
    %c0_27 = arith.constant 0 : index
    %c0_28 = arith.constant 0 : index
    %c0_29 = arith.constant 0 : index
    %45 = vector.load %arg5[%c0_27, %c0_28, %c0_29] : memref<2x8x128xf32, #tpu.memory_space<vmem>>, vector<1x8x128xf32>
    %46 = vector.shape_cast %45 : vector<1x8x128xf32> to vector<8x128xf32>
    %47 = vector.shape_cast %44 : vector<8x128xf32> to vector<1x8x128xf32>
    tpu.vector_store %arg5[%c0_27, %c0_28, %c0_29], %47 {strides = array<i32>} : memref<2x8x128xf32, #tpu.memory_space<vmem>>, vector<1x8x128xf32>,
    %48 = vector.extract_strided_slice %3 {offsets = [0, 128], sizes = [8, 128], strides = [1, 1]} : vector<8x256xf32> to vector<8x128xf32>
    %c0_30 = arith.constant 0 : index
    %c1_31 = arith.constant 1 : index
    %c0_32 = arith.constant 0 : index
    %c0_33 = arith.constant 0 : index
    %49 = vector.load %arg4[%c0_30, %c1_31, %c0_32, %c0_33] : memref<1x2x3x128xf32, #tpu.memory_space<vmem>>, vector<1x1x1x128xf32>
    %50 = vector.shape_cast %49 : vector<1x1x1x128xf32> to vector<1x128xf32>
    %51 = vector.broadcast %50 : vector<1x128xf32> to vector<8x128xf32>
    %52 = arith.addf %48, %51 : vector<8x128xf32>
    %53 = arith.negf %52 : vector<8x128xf32>
    %54 = math.exp %53 : vector<8x128xf32>
    %cst_34 = arith.constant 1.000000e+00 : f32
    %55 = vector.broadcast %cst_34 : f32 to vector<8x128xf32>
    %56 = arith.addf %55, %54 : vector<8x128xf32>
    %57 = arith.divf %55, %56 : vector<8x128xf32>
    %c0_35 = arith.constant 0 : index
    %c1_36 = arith.constant 1 : index
    %c0_37 = arith.constant 0 : index
    %c0_38 = arith.constant 0 : index
    %58 = vector.load %arg3[%c0_35, %c1_36, %c0_37, %c0_38] : memref<1x2x128x256xbf16, #tpu.memory_space<vmem>>, vector<1x1x128x128xbf16>
    %59 = vector.shape_cast %58 : vector<1x1x128x128xbf16> to vector<128x128xbf16>
    %c0_39 = arith.constant 0 : index
    %c1_40 = arith.constant 1 : index
    %c0_41 = arith.constant 0 : index
    %c128_42 = arith.constant 128 : index
    %60 = vector.load %arg3[%c0_39, %c1_40, %c0_41, %c128_42] : memref<1x2x128x256xbf16, #tpu.memory_space<vmem>>, vector<1x1x128x128xbf16>
    %61 = vector.shape_cast %60 : vector<1x1x128x128xbf16> to vector<128x128xbf16>
    %62 = arith.truncf %57 : vector<8x128xf32> to vector<8x128xbf16>
    %cst_43 = arith.constant dense<0.000000e+00> : vector<8x128xf32>
    %63 = tpu.matmul %62, %59, %cst_43 {dimension_numbers = #tpu.dot_dimension_numbers<[1], [0], [0], [1], [0, 0, 1, 1], [], []>} : vector<8x128xbf16>, vector<128x128xbf16>, vector<8x128xf32> -> vector<8x128xf32>
    %c0_44 = arith.constant 0 : index
    %c1_45 = arith.constant 1 : index
    %c1_46 = arith.constant 1 : index
    %c0_47 = arith.constant 0 : index
    %64 = vector.load %arg4[%c0_44, %c1_45, %c1_46, %c0_47] : memref<1x2x3x128xf32, #tpu.memory_space<vmem>>, vector<1x1x1x128xf32>
    %65 = vector.shape_cast %64 : vector<1x1x1x128xf32> to vector<1x128xf32>
    %66 = vector.broadcast %65 : vector<1x128xf32> to vector<8x128xf32>
    %67 = arith.addf %63, %66 : vector<8x128xf32>
    %68 = arith.negf %67 : vector<8x128xf32>
    %69 = math.exp %68 : vector<8x128xf32>
    %cst_48 = arith.constant 1.000000e+00 : f32
    %70 = vector.broadcast %cst_48 : f32 to vector<8x128xf32>
    %71 = arith.addf %70, %69 : vector<8x128xf32>
    %72 = arith.divf %70, %71 : vector<8x128xf32>
    %73 = arith.truncf %72 : vector<8x128xf32> to vector<8x128xbf16>
    %cst_49 = arith.constant dense<0.000000e+00> : vector<8x128xf32>
    %74 = tpu.matmul %73, %61, %cst_49 {dimension_numbers = #tpu.dot_dimension_numbers<[1], [0], [0], [1], [0, 0, 1, 1], [], []>} : vector<8x128xbf16>, vector<128x128xbf16>, vector<8x128xf32> -> vector<8x128xf32>
    %c0_50 = arith.constant 0 : index
    %c1_51 = arith.constant 1 : index
    %c2_52 = arith.constant 2 : index
    %c0_53 = arith.constant 0 : index
    %75 = vector.load %arg4[%c0_50, %c1_51, %c2_52, %c0_53] : memref<1x2x3x128xf32, #tpu.memory_space<vmem>>, vector<1x1x1x128xf32>
    %76 = vector.shape_cast %75 : vector<1x1x1x128xf32> to vector<1x128xf32>
    %77 = vector.broadcast %76 : vector<1x128xf32> to vector<8x128xf32>
    %78 = arith.addf %74, %77 : vector<8x128xf32>
    %cst_54 = arith.constant dense<0xFF800000> : vector<8xf32>
    %79 = vector.multi_reduction <maximumf>, %78, %cst_54 [1] : vector<8x128xf32> to vector<8xf32>
    %80 = vector.shape_cast %79 : vector<8xf32> to vector<8x1xf32>
    %81 = vector.broadcast %80 : vector<8x1xf32> to vector<8x128xf32>
    %82 = arith.subf %78, %81 : vector<8x128xf32>
    %83 = math.exp %82 : vector<8x128xf32>
    %cst_55 = arith.constant dense<0.000000e+00> : vector<8xf32>
    %84 = vector.multi_reduction <add>, %83, %cst_55 [1] : vector<8x128xf32> to vector<8xf32>
    %85 = vector.shape_cast %84 : vector<8xf32> to vector<8x1xf32>
    %86 = math.log %85 : vector<8x1xf32>
    %87 = vector.broadcast %86 : vector<8x1xf32> to vector<8x128xf32>
    %88 = arith.subf %82, %87 : vector<8x128xf32>
    %c1_56 = arith.constant 1 : index
    %c0_57 = arith.constant 0 : index
    %c0_58 = arith.constant 0 : index
    %89 = vector.load %arg5[%c1_56, %c0_57, %c0_58] : memref<2x8x128xf32, #tpu.memory_space<vmem>>, vector<1x8x128xf32>
    %90 = vector.shape_cast %89 : vector<1x8x128xf32> to vector<8x128xf32>
    %91 = vector.shape_cast %88 : vector<8x128xf32> to vector<1x8x128xf32>
    tpu.vector_store %arg5[%c1_56, %c0_57, %c0_58], %91 {strides = array<i32>} : memref<2x8x128xf32, #tpu.memory_space<vmem>>, vector<1x8x128xf32>,
    return
  }
  func.func @transform_0(%arg0: i32) -> (i32, i32) {
    %c0_i32 = arith.constant 0 : i32
    %c0_i32_0 = arith.constant 0 : i32
    %c0_i32_1 = arith.constant 0 : i32
    return %c0_i32, %c0_i32_0 : i32, i32
  }
  func.func @transform_1(%arg0: i32) -> (i32, i32, i32) {
    %c0_i32 = arith.constant 0 : i32
    %c0_i32_0 = arith.constant 0 : i32
    %c0_i32_1 = arith.constant 0 : i32
    return %arg0, %c0_i32, %c0_i32_0 : i32, i32, i32
  }
  func.func @transform_2(%arg0: i32) -> (i32, i32, i32, i32) {
    %c0_i32 = arith.constant 0 : i32
    %c0_i32_0 = arith.constant 0 : i32
    %c0_i32_1 = arith.constant 0 : i32
    %c0_i32_2 = arith.constant 0 : i32
    return %arg0, %c0_i32, %c0_i32_0, %c0_i32_1 : i32, i32, i32, i32
  }
  func.func @transform_3(%arg0: i32) -> (i32, i32, i32, i32) {
    %c0_i32 = arith.constant 0 : i32
    %c0_i32_0 = arith.constant 0 : i32
    %c0_i32_1 = arith.constant 0 : i32
    %c0_i32_2 = arith.constant 0 : i32
    return %arg0, %c0_i32, %c0_i32_0, %c0_i32_1 : i32, i32, i32, i32
  }
  func.func @transform_4(%arg0: i32) -> (i32, i32, i32) {
    %c0_i32 = arith.constant 0 : i32
    %c0_i32_0 = arith.constant 0 : i32
    %c0_i32_1 = arith.constant 0 : i32
    return %arg0, %c0_i32, %c0_i32_0 : i32, i32, i32
  }
}

</mosaic_0001>

<llo_original>
// kernel: tpu_custom_call.1
$region0: #{tpu_custom_call.1}
  #allocation0 [shape = 'u32[]', space=smem, size = 0x4, offset = 0x4, fixed_abs, tag = 'smem constant byte address 0x4 - core index']
  #allocation1 [shape = 'u32[144,128]{1,0:T(1,128)}', space=vmem, size = 0x12000, scoped, tag = 'internal scratch']
  %s0 = inlined_call_operand.vmem [shape: bf16[8,128], index: 0, kind: input, shape index: {}]
  %s1 = inlined_call_operand.hbm [shape: bf16[2,128,256], index: 1, kind: input, shape index: {}]
  %s2 = inlined_call_operand.hbm [shape: bf16[2,2,128,256], index: 2, kind: input, shape index: {}]
  %s3 = inlined_call_operand.vmem [shape: f32[2,2,3,128], index: 3, kind: input, shape index: {}]
  %s4 = inlined_call_operand.hbm [shape: f32[4,8,128], index: 4, kind: output, shape index: {}]
  %s5 = sld [smem:[#allocation0]]
  $region57: #{tpu_custom_call.1} parent=0
    _
  %s7 = ssub.s32 1, %s5
  %s8 = scalar_select 0, %s7, %s5
  $region1: #{tpu_custom_call.1} parent=0
    #allocation2 [shape = 'u8[131072]{0}', space=vmem, size = 0x20000, scoped, tag = 'input window, operand 1']
    #allocation3 [shape = 's32[2]{0}', space=sflag, size = 0x8, scoped, tag = 'scoped memory for tpu_custom_call.1']
    #allocation4 [shape = 's32[2]{0}', space=sflag, size = 0x8, scoped, tag = 'scoped memory for tpu_custom_call.1']
    #allocation5 [shape = 'u8[262144]{0}', space=vmem, size = 0x40000, scoped, tag = 'input window, operand 2']
    #allocation6 [shape = 's32[2]{0}', space=sflag, size = 0x8, scoped, tag = 'scoped memory for tpu_custom_call.1']
    #allocation7 [shape = 'u8[16384]{0}', space=vmem, size = 0x4000, scoped, tag = 'output window, operand 0']
    %9 = vsyncpa [#allocation3], 0
    %s10 = scalar_lea.sflag [#allocation3], 1
    %11 = vsyncpa %s10, 0
    %12 = vsyncpa [#allocation6], 0
    %s13 = scalar_lea.sflag [#allocation6], 1
    %14 = vsyncpa %s13, 0
    %15 = vsyncpa [#allocation4], 0
    %s16 = scalar_lea.sflag [#allocation4], 1
    %17 = vsyncpa %s16, 0
    loop: start=0, step=1, limit=4
    $region2: #{tpu_custom_call.1} parent=1 // loop_pre_header
      _
    $region3: #{tpu_custom_call.1} parent=1 // loop_header
      %s19 = sphi 0, %s23
      %p20 = scmp.ge.s32.totalorder %s19, 4
      %s27 = sphi 0, %s27
      %s29 = sphi 0, %s27
      %s30 = sphi 0, %s29
      %s44 = sphi 0, %s30
      %s50 = sphi 0, %s52
      %s53 = sphi 0, %s50
      %s54 = sphi 0, %s53
      %s70 = sphi 0, %s54
      %s76 = sphi 0, %s78
      %s79 = sphi 0, %s76
      %s80 = sphi 0, %s79
      %s96 = sphi 0, %s80
      %s102 = sphi 0, %s104
      %s105 = sphi 0, %s102
      %s106 = sphi 0, %s105
      %s122 = sphi 0, %s106
      %s128 = sphi 0, %s130
      %s131 = sphi 0, %s128
      %s132 = sphi 0, %s131
      %s148 = sphi 0, %s132
    $region4: #{tpu_custom_call.1} parent=1 // loop_header_branch
      %22 = sbr.rel (%p20) target = $region8
    $region5: #{tpu_custom_call.1} parent=1 // loop_body
      %s24 = ssub.s32 %s19, 1
      %s25 = ssub.s32 %s19, 2
      %s26 = sadd.s32 %s19, 1
      %s28 = sadd.s32 %s27, 1
      %p31 = scmp.eq.s32.totalorder %s19, 1
      %p32 = scmp.ne.s32.totalorder %s27, %s29
      %p33 = scmp.eq.s32.totalorder %s19, 0
      %p34 = por %p32, %p33
      %p35 = scmp.ne.s32.totalorder %s27, %s29
      %p36 = scmp.eq.s32.totalorder %s24, 1
      %p37 = por %p35, %p36
      %p38 = scmp.ne.s32.totalorder %s29, %s30
      %p39 = scmp.eq.s32.totalorder %s24, 0
      %p40 = por %p38, %p39
      %p41 = scmp.ne.s32.totalorder %s29, %s30
      %p42 = scmp.eq.s32.totalorder %s25, 1
      %p43 = por %p41, %p42
      %p45 = scmp.ne.s32.totalorder %s30, %s44
      %p46 = scmp.eq.s32.totalorder %s25, 0
      %p47 = por %p45, %p46
      %s48 = ssub.s32 %s19, %s26
      %p49 = scmp.eq.s32.totalorder %s48, 0
      %s51 = sadd.s32 %s50, 1
      %s52 = scalar_select %p49, %s50, %s51
      %p55 = pneg %p49
      %p56 = scmp.eq.s32.totalorder %s19, 1
      %p57 = por %p55, %p56
      %p58 = scmp.ne.s32.totalorder %s50, %s53
      %p59 = scmp.eq.s32.totalorder %s19, 0
      %p60 = por %p58, %p59
      %p61 = scmp.ne.s32.totalorder %s50, %s53
      %p62 = scmp.eq.s32.totalorder %s24, 1
      %p63 = por %p61, %p62
      %p64 = scmp.ne.s32.totalorder %s53, %s54
      %p65 = scmp.eq.s32.totalorder %s24, 0
      %p66 = por %p64, %p65
      %p67 = scmp.ne.s32.totalorder %s53, %s54
      %p68 = scmp.eq.s32.totalorder %s25, 1
      %p69 = por %p67, %p68
      %p71 = scmp.ne.s32.totalorder %s54, %s70
      %p72 = scmp.eq.s32.totalorder %s25, 0
      %p73 = por %p71, %p72
      %s74 = ssub.s32 %s19, %s26
      %p75 = scmp.eq.s32.totalorder %s74, 0
      %s77 = sadd.s32 %s76, 1
      %s78 = scalar_select %p75, %s76, %s77
      %p81 = pneg %p75
      %p82 = scmp.eq.s32.totalorder %s19, 1
      %p83 = por %p81, %p82
      %p84 = scmp.ne.s32.totalorder %s76, %s79
      %p85 = scmp.eq.s32.totalorder %s19, 0
      %p86 = por %p84, %p85
      %p87 = scmp.ne.s32.totalorder %s76, %s79
      %p88 = scmp.eq.s32.totalorder %s24, 1
      %p89 = por %p87, %p88
      %p90 = scmp.ne.s32.totalorder %s79, %s80
      %p91 = scmp.eq.s32.totalorder %s24, 0
      %p92 = por %p90, %p91
      %p93 = scmp.ne.s32.totalorder %s79, %s80
      %p94 = scmp.eq.s32.totalorder %s25, 1
      %p95 = por %p93, %p94
      %p97 = scmp.ne.s32.totalorder %s80, %s96
      %p98 = scmp.eq.s32.totalorder %s25, 0
      %p99 = por %p97, %p98
      %s100 = ssub.s32 %s19, %s26
      %p101 = scmp.eq.s32.totalorder %s100, 0
      %s103 = sadd.s32 %s102, 1
      %s104 = scalar_select %p101, %s102, %s103
      %p107 = pneg %p101
      %p108 = scmp.eq.s32.totalorder %s19, 1
      %p109 = por %p107, %p108
      %p110 = scmp.ne.s32.totalorder %s102, %s105
      %p111 = scmp.eq.s32.totalorder %s19, 0
      %p112 = por %p110, %p111
      %p113 = scmp.ne.s32.totalorder %s102, %s105
      %p114 = scmp.eq.s32.totalorder %s24, 1
      %p115 = por %p113, %p114
      %p116 = scmp.ne.s32.totalorder %s105, %s106
      %p117 = scmp.eq.s32.totalorder %s24, 0
      %p118 = por %p116, %p117
      %p119 = scmp.ne.s32.totalorder %s105, %s106
      %p120 = scmp.eq.s32.totalorder %s25, 1
      %p121 = por %p119, %p120
      %p123 = scmp.ne.s32.totalorder %s106, %s122
      %p124 = scmp.eq.s32.totalorder %s25, 0
      %p125 = por %p123, %p124
      %s126 = ssub.s32 %s19, %s26
      %p127 = scmp.eq.s32.totalorder %s126, 0
      %s129 = sadd.s32 %s128, 1
      %s130 = scalar_select %p127, %s128, %s129
      %p133 = pneg %p127
      %p134 = scmp.eq.s32.totalorder %s19, 1
      %p135 = por %p133, %p134
      %p136 = scmp.ne.s32.totalorder %s128, %s131
      %p137 = scmp.eq.s32.totalorder %s19, 0
      %p138 = por %p136, %p137
      %p139 = scmp.ne.s32.totalorder %s128, %s131
      %p140 = scmp.eq.s32.totalorder %s24, 1
      %p141 = por %p139, %p140
      %p142 = scmp.ne.s32.totalorder %s131, %s132
      %p143 = scmp.eq.s32.totalorder %s24, 0
      %p144 = por %p142, %p143
      %p145 = scmp.ne.s32.totalorder %s131, %s132
      %p146 = scmp.eq.s32.totalorder %s25, 1
      %p147 = por %p145, %p146
      %p149 = scmp.ne.s32.totalorder %s132, %s148
      %p150 = scmp.eq.s32.totalorder %s25, 0
      %p151 = por %p149, %p150
      %p152 = scmp.le.s32.totalorder 1, %s19
      %p153 = scmp.lt.s32.totalorder %s19, 3
      %p154 = pnand %p152, %p153
      %p155 = pneg %p154
      // Predicated region
      $region9: #{tpu_custom_call.1} parent=5 // pred_check
        _
      $region10: #{tpu_custom_call.1} parent=5 // pred_check_branch
        %157 = sbr.rel (%p154) target = $region12
      $region11: #{tpu_custom_call.1} parent=5 // pred_region
        %s158 = ssub.s32 %s19, 1
        // Predicated region
        $region13: #{tpu_custom_call.1} parent=11 // pred_check
          %p159 = pneg %p40
        $region14: #{tpu_custom_call.1} parent=11 // pred_check_branch
          %161 = sbr.rel (%p159) target = $region16
        $region15: #{tpu_custom_call.1} parent=11 // pred_region
          _
        $region16: #{tpu_custom_call.1} parent=11 // pred_fallthru
          _
      $region12: #{tpu_custom_call.1} parent=5 // pred_fallthru
        _
      %p162 = scmp.lt.s32.totalorder %s19, 2
      // Predicated region
      $region17: #{tpu_custom_call.1} parent=5 // pred_check
        %p163 = pneg %p162
      $region18: #{tpu_custom_call.1} parent=5 // pred_check_branch
        %165 = sbr.rel (%p163) target = $region20
      $region19: #{tpu_custom_call.1} parent=5 // pred_region
        // Predicated region
        $region21: #{tpu_custom_call.1} parent=19 // pred_check
          %p166 = pneg %p60
        $region22: #{tpu_custom_call.1} parent=19 // pred_check_branch
          %168 = sbr.rel (%p166) target = $region24
        $region23: #{tpu_custom_call.1} parent=19 // pred_region
          %s169 = sand.u32 %s50, 1
          %s170 = scalar_lea.sflag [#allocation3], %s169
          %s171 = sand.u32 %s50, 1
          %s172 = smul.addr %s171, 128
          %s173 = scalar_lea.vmem [#allocation2], %s172
          %s175 = ssub.s32 2048, 2048
          %176 = vsyncadd %s170, %s175
          %s177 = smul.addr %s19, 32
          %s178 = smul.addr %s177, 64
          %s179 = scalar_lea.hbm %s1, %s178
          %s180 = sshll.u32 %s173, 4
          %s181 = int_to_ptr.vmem [resolvable:$true] %s180
          %186 = dma.hbm_to_vmem [thread:$0]  %s179, 2048, %s181, %s170, 128, 128, 8
        $region24: #{tpu_custom_call.1} parent=19 // pred_fallthru
          _
        // Predicated region
        $region25: #{tpu_custom_call.1} parent=19 // pred_check
          %p187 = pneg %p86
        $region26: #{tpu_custom_call.1} parent=19 // pred_check_branch
          %189 = sbr.rel (%p187) target = $region28
        $region27: #{tpu_custom_call.1} parent=19 // pred_region
          %s190 = sand.u32 %s76, 1
          %s191 = scalar_lea.sflag [#allocation6], %s190
          %s192 = sand.u32 %s76, 1
          %s193 = smul.addr %s192, 256
          %s194 = scalar_lea.vmem [#allocation5], %s193
          %s196 = ssub.s32 4096, 4096
          %197 = vsyncadd %s191, %s196
          %s198 = smul.addr %s19, 64
          %s199 = smul.addr %s198, 64
          %s200 = scalar_lea.hbm %s2, %s199
          %s201 = sshll.u32 %s194, 4
          %s202 = int_to_ptr.vmem [resolvable:$true] %s201
          %207 = dma.hbm_to_vmem [thread:$0]  %s200, 4096, %s202, %s191, 128, 128, 8
        $region28: #{tpu_custom_call.1} parent=19 // pred_fallthru
          _
        // Predicated region
        $region29: #{tpu_custom_call.1} parent=19 // pred_check
          %p208 = pneg %p112
        $region30: #{tpu_custom_call.1} parent=19 // pred_check_branch
          %210 = sbr.rel (%p208) target = $region32
        $region31: #{tpu_custom_call.1} parent=19 // pred_region
          %p211 = scmp.lt.s32.totalorder %s19, 1
          %s212 = scalar_select %p211, %s19, 1
          %s213 = smul.addr %s212, 2
          %s214 = smul.addr %s213, 4
          %s215 = scalar_lea.vmem %s3, %s214
        $region32: #{tpu_custom_call.1} parent=19 // pred_fallthru
          _
      $region20: #{tpu_custom_call.1} parent=5 // pred_fallthru
        _
      %p216 = scmp.le.s32.totalorder 1, %s19
      %p217 = scmp.lt.s32.totalorder %s19, 3
      %p218 = pnand %p216, %p217
      %p219 = pneg %p218
      // Predicated region
      $region33: #{tpu_custom_call.1} parent=5 // pred_check
        _
      $region34: #{tpu_custom_call.1} parent=5 // pred_check_branch
        %221 = sbr.rel (%p218) target = $region36
      $region35: #{tpu_custom_call.1} parent=5 // pred_region
        %s222 = ssub.s32 %s19, 1
        %s223 = sand.u32 %s53, 1
        %s224 = scalar_lea.sflag [#allocation3], %s223
        %s225 = sand.u32 %s53, 1
        %s226 = smul.addr %s225, 128
        %s227 = scalar_lea.vmem [#allocation2], %s226
        // Predicated region
        $region37: #{tpu_custom_call.1} parent=35 // pred_check
          %p228 = pneg %p66
        $region38: #{tpu_custom_call.1} parent=35 // pred_check_branch
          %230 = sbr.rel (%p228) target = $region40
        $region39: #{tpu_custom_call.1} parent=35 // pred_region
          %231 = dma.done %s224, 2048
        $region40: #{tpu_custom_call.1} parent=35 // pred_fallthru
          _
        %s232 = sand.u32 %s79, 1
        %s233 = scalar_lea.sflag [#allocation6], %s232
        %s234 = sand.u32 %s79, 1
        %s235 = smul.addr %s234, 256
        %s236 = scalar_lea.vmem [#allocation5], %s235
        // Predicated region
        $region41: #{tpu_custom_call.1} parent=35 // pred_check
          %p237 = pneg %p92
        $region42: #{tpu_custom_call.1} parent=35 // pred_check_branch
          %239 = sbr.rel (%p237) target = $region44
        $region43: #{tpu_custom_call.1} parent=35 // pred_region
          %240 = dma.done %s233, 4096
        $region44: #{tpu_custom_call.1} parent=35 // pred_fallthru
          _
        %p241 = pneg %p40
        %p242 = pneg %p37
        %s243 = sand.u32 %s53, 1
        %s244 = scalar_lea.sflag [#allocation3], %s243
        %s245 = sand.u32 %s53, 1
        %s246 = smul.addr %s245, 128
        %s247 = scalar_lea.vmem [#allocation2], %s246
        %p248 = pneg %p66
        %p249 = pneg %p63
        %s250 = sand.u32 %s79, 1
        %s251 = scalar_lea.sflag [#allocation6], %s250
        %s252 = sand.u32 %s79, 1
        %s253 = smul.addr %s252, 256
        %s254 = scalar_lea.vmem [#allocation5], %s253
        %p255 = pneg %p92
        %p256 = pneg %p89
        %p257 = scmp.lt.s32.totalorder %s24, 1
        %s258 = scalar_select %p257, %s24, 1
        %s259 = smul.addr %s258, 2
        %s260 = smul.addr %s259, 4
        %s261 = scalar_lea.vmem %s3, %s260
        %p262 = pneg %p118
        %p263 = pneg %p115
        %p264 = pneg %p144
        %p265 = pneg %p141
        %s266 = sand.u32 %s131, 1
        %s267 = scalar_lea.sflag [#allocation4], %s266
        %s268 = sand.u32 %s131, 1
        %s269 = smul.addr %s268, 16
        %s270 = scalar_lea.vmem [#allocation7], %s269
        %p271 = scmp.lt.s32.totalorder %s24, 1
        %s272 = scalar_select %p271, %s24, 1
        %s273 = smul.addr %s272, 2
        %s274 = smul.addr %s273, 4
        %s275 = scalar_lea.vmem %s3, %s274
        %s276 = smul.u32 2, %s24
        %v278 = vld [vmem:[%s0] sm:$0xf]
        %v279 = vld [vmem:[%s227] sm:$0xff]
        %v280 = vld [vmem:[%s227 + $0x8] sm:$0xff]
        %v281 = vld [vmem:[%s227 + $0x10] sm:$0xff]
        %v282 = vld [vmem:[%s227 + $0x18] sm:$0xff]
        %v283 = vld [vmem:[%s227 + $0x20] sm:$0xff]
        %v284 = vld [vmem:[%s227 + $0x28] sm:$0xff]
        %v285 = vld [vmem:[%s227 + $0x30] sm:$0xff]
        %v286 = vld [vmem:[%s227 + $0x38] sm:$0xff]
        %v287 = vld [vmem:[%s227 + $0x40] sm:$0xff]
        %v288 = vld [vmem:[%s227 + $0x48] sm:$0xff]
        %v289 = vld [vmem:[%s227 + $0x50] sm:$0xff]
        %v290 = vld [vmem:[%s227 + $0x58] sm:$0xff]
        %v291 = vld [vmem:[%s227 + $0x60] sm:$0xff]
        %v292 = vld [vmem:[%s227 + $0x68] sm:$0xff]
        %v293 = vld [vmem:[%s227 + $0x70] sm:$0xff]
        %v294 = vld [vmem:[%s227 + $0x78] sm:$0xff]
        %v311 = vunpack.c.l.b16 %v279
        %v312 = vunpack.c.h.b16 %v279
        %v313 = vunpack.c.l.b16 %v280
        %v314 = vunpack.c.h.b16 %v280
        %v315 = vunpack.c.l.b16 %v281
        %v316 = vunpack.c.h.b16 %v281
        %v317 = vunpack.c.l.b16 %v282
        %v318 = vunpack.c.h.b16 %v282
        %v319 = vunpack.c.l.b16 %v283
        %v320 = vunpack.c.h.b16 %v283
        %v321 = vunpack.c.l.b16 %v284
        %v322 = vunpack.c.h.b16 %v284
        %v323 = vunpack.c.l.b16 %v285
        %v324 = vunpack.c.h.b16 %v285
        %v325 = vunpack.c.l.b16 %v286
        %v326 = vunpack.c.h.b16 %v286
        %v327 = vunpack.c.l.b16 %v287
        %v328 = vunpack.c.h.b16 %v287
        %v329 = vunpack.c.l.b16 %v288
        %v330 = vunpack.c.h.b16 %v288
        %v331 = vunpack.c.l.b16 %v289
        %v332 = vunpack.c.h.b16 %v289
        %v333 = vunpack.c.l.b16 %v290
        %v334 = vunpack.c.h.b16 %v290
        %v335 = vunpack.c.l.b16 %v291
        %v336 = vunpack.c.h.b16 %v291
        %v337 = vunpack.c.l.b16 %v292
        %v338 = vunpack.c.h.b16 %v292
        %v339 = vunpack.c.l.b16 %v293
        %v340 = vunpack.c.h.b16 %v293
        %v341 = vunpack.c.l.b16 %v294
        %v342 = vunpack.c.h.b16 %v294
        %v343 = vpack.c.b16 %v313, %v311
        %v344 = vpack.c.b16 %v314, %v312
        %v345 = vpack.c.b16 %v317, %v315
        %v346 = vpack.c.b16 %v318, %v316
        %v347 = vpack.c.b16 %v321, %v319
        %v348 = vpack.c.b16 %v322, %v320
        %v349 = vpack.c.b16 %v325, %v323
        %v350 = vpack.c.b16 %v326, %v324
        %v351 = vpack.c.b16 %v329, %v327
        %v352 = vpack.c.b16 %v330, %v328
        %v353 = vpack.c.b16 %v333, %v331
        %v354 = vpack.c.b16 %v334, %v332
        %v355 = vpack.c.b16 %v337, %v335
        %v356 = vpack.c.b16 %v338, %v336
        %v357 = vpack.c.b16 %v341, %v339
        %v358 = vpack.c.b16 %v342, %v340
        %375 = vmatprep.subr.bf16.mxu0 %v344
        %376 = vmatpush1.bf16.msra.mxu0 %v343
        %377 = vmatprep.subr.bf16.mxu0 %v346
        %378 = vmatpush1.bf16.msra.mxu0 %v345
        %379 = vmatprep.subr.bf16.mxu0 %v348
        %380 = vmatpush1.bf16.msra.mxu0 %v347
        %381 = vmatprep.subr.bf16.mxu0 %v350
        %382 = vmatpush1.bf16.msra.mxu0 %v349
        %383 = vmatprep.subr.bf16.mxu0 %v352
        %384 = vmatpush1.bf16.msra.mxu0 %v351
        %385 = vmatprep.subr.bf16.mxu0 %v354
        %386 = vmatpush1.bf16.msra.mxu0 %v353
        %387 = vmatprep.subr.bf16.mxu0 %v356
        %388 = vmatpush1.bf16.msra.mxu0 %v355
        %389 = vmatprep.subr.bf16.mxu0 %v358
        %390 = vmatpush1.bf16.msra.mxu0 %v357
        %391 = vmatprep.subr.bf16.mxu0 0
        %392 = vmatpush1.bf16.msra.mxu0 0
        %393 = vmatprep.subr.bf16.mxu0 0
        %394 = vmatpush1.bf16.msra.mxu0 0
        %395 = vmatprep.subr.bf16.mxu0 0
        %396 = vmatpush1.bf16.msra.mxu0 0
        %397 = vmatprep.subr.bf16.mxu0 0
        %398 = vmatpush1.bf16.msra.mxu0 0
        %399 = vmatprep.subr.bf16.mxu0 0
        %400 = vmatpush1.bf16.msra.mxu0 0
        %401 = vmatprep.subr.bf16.mxu0 0
        %402 = vmatpush1.bf16.msra.mxu0 0
        %403 = vmatprep.subr.bf16.mxu0 0
        %404 = vmatpush1.bf16.msra.mxu0 0
        %405 = vmatprep.subr.bf16.mxu0 0
        %406 = vmatpush1.bf16.msra.mxu0 0
        %407 = vmatprep.mubr.bf16.mxu0 0
        %408 = vmatmul.mubr.bf16.gmra.mrb[0].mxu0 %v278
        %v409 = vpop.f32.mrb[0].mxu0
        %v410 = vadd.f32 0.0, %v409
        %v411 = vpop.f32.mrb[0].mxu0
        %v412 = vadd.f32 0.0, %v411
        %v413 = vpop.f32.mrb[0].mxu0
        %v414 = vpop.f32.mrb[0].mxu0
        %415 = vdwg.mxu0
        %v416 = vld [vmem:[%s275] sm:$0x1]
        %v417 = vlaneseq
        %v418 = vshrl.u32 %v417, 7
        %v419 = vsub.s32 0, %v418
        %v420 = vrot.slane %v416, %v419
        %v421 = vadd.f32 %v410, %v420
        %v422 = vxor.u32 %v421, 2147483648
        %v423 = vmul.f32 %v422, 1.442695
        %v424 = vpow.pop %v423
        %v425 = vadd.f32 %v424, 1.0
        %v426 = vrcp.pop %v425
        %v427 = vmul.f32 1.0, %v426
        %v428 = vld [vmem:[%s236] sm:$0xf]
        %v429 = vld [vmem:[%s236 + $0x8] sm:$0xf]
        %v430 = vld [vmem:[%s236 + $0x10] sm:$0xf]
        %v431 = vld [vmem:[%s236 + $0x18] sm:$0xf]
        %v432 = vld [vmem:[%s236 + $0x20] sm:$0xf]
        %v433 = vld [vmem:[%s236 + $0x28] sm:$0xf]
        %v434 = vld [vmem:[%s236 + $0x30] sm:$0xf]
        %v435 = vld [vmem:[%s236 + $0x38] sm:$0xf]
        %v436 = vld [vmem:[%s236 + $0x40] sm:$0xf]
        %v437 = vld [vmem:[%s236 + $0x48] sm:$0xf]
        %v438 = vld [vmem:[%s236 + $0x50] sm:$0xf]
        %v439 = vld [vmem:[%s236 + $0x58] sm:$0xf]
        %v440 = vld [vmem:[%s236 + $0x60] sm:$0xf]
        %v441 = vld [vmem:[%s236 + $0x68] sm:$0xf]
        %v442 = vld [vmem:[%s236 + $0x70] sm:$0xf]
        %v443 = vld [vmem:[%s236 + $0x78] sm:$0xf]
        %v444 = vld [vmem:[%s236 + $0x4] sm:$0xf]
        %v445 = vld [vmem:[%s236 + $0xc] sm:$0xf]
        %v446 = vld [vmem:[%s236 + $0x14] sm:$0xf]
        %v447 = vld [vmem:[%s236 + $0x1c] sm:$0xf]
        %v448 = vld [vmem:[%s236 + $0x24] sm:$0xf]
        %v449 = vld [vmem:[%s236 + $0x2c] sm:$0xf]
        %v450 = vld [vmem:[%s236 + $0x34] sm:$0xf]
        %v451 = vld [vmem:[%s236 + $0x3c] sm:$0xf]
        %v452 = vld [vmem:[%s236 + $0x44] sm:$0xf]
        %v453 = vld [vmem:[%s236 + $0x4c] sm:$0xf]
        %v454 = vld [vmem:[%s236 + $0x54] sm:$0xf]
        %v455 = vld [vmem:[%s236 + $0x5c] sm:$0xf]
        %v456 = vld [vmem:[%s236 + $0x64] sm:$0xf]
        %v457 = vld [vmem:[%s236 + $0x6c] sm:$0xf]
        %v458 = vld [vmem:[%s236 + $0x74] sm:$0xf]
        %v459 = vld [vmem:[%s236 + $0x7c] sm:$0xf]
        %v460 = vpack.c.bf16 %v427, %v427
        %v461 = vld [vmem:[%s275 + $0x1] sm:$0x1]
        %v462 = vlaneseq
        %v463 = vshrl.u32 %v462, 7
        %v464 = vsub.s32 0, %v463
        %v465 = vrot.slane %v461, %v464
        %v482 = vunpack.c.l.b16 %v428
        %v483 = vunpack.c.l.b16 %v429
        %v484 = vunpack.c.l.b16 %v430
        %v485 = vunpack.c.l.b16 %v431
        %v486 = vunpack.c.l.b16 %v432
        %v487 = vunpack.c.l.b16 %v433
        %v488 = vunpack.c.l.b16 %v434
        %v489 = vunpack.c.l.b16 %v435
        %v490 = vunpack.c.l.b16 %v436
        %v491 = vunpack.c.l.b16 %v437
        %v492 = vunpack.c.l.b16 %v438
        %v493 = vunpack.c.l.b16 %v439
        %v494 = vunpack.c.l.b16 %v440
        %v495 = vunpack.c.l.b16 %v441
        %v496 = vunpack.c.l.b16 %v442
        %v497 = vunpack.c.l.b16 %v443
        %v498 = vpack.c.b16 %v483, %v482
        %v499 = vpack.c.b16 %v485, %v484
        %v500 = vpack.c.b16 %v487, %v486
        %v501 = vpack.c.b16 %v489, %v488
        %v502 = vpack.c.b16 %v491, %v490
        %v503 = vpack.c.b16 %v493, %v492
        %v504 = vpack.c.b16 %v495, %v494
        %v505 = vpack.c.b16 %v497, %v496
        %514 = vmatprep.subr.bf16.mxu0 0
        %515 = vmatpush1.bf16.msra.mxu0 %v498
        %516 = vmatprep.subr.bf16.mxu0 0
        %517 = vmatpush1.bf16.msra.mxu0 %v499
        %518 = vmatprep.subr.bf16.mxu0 0
        %519 = vmatpush1.bf16.msra.mxu0 %v500
        %520 = vmatprep.subr.bf16.mxu0 0
        %521 = vmatpush1.bf16.msra.mxu0 %v501
        %522 = vmatprep.subr.bf16.mxu0 0
        %523 = vmatpush1.bf16.msra.mxu0 %v502
        %524 = vmatprep.subr.bf16.mxu0 0
        %525 = vmatpush1.bf16.msra.mxu0 %v503
        %526 = vmatprep.subr.bf16.mxu0 0
        %527 = vmatpush1.bf16.msra.mxu0 %v504
        %528 = vmatprep.subr.bf16.mxu0 0
        %529 = vmatpush1.bf16.msra.mxu0 %v505
        %530 = vmatprep.subr.bf16.mxu0 0
        %531 = vmatpush1.bf16.msra.mxu0 0
        %532 = vmatprep.subr.bf16.mxu0 0
        %533 = vmatpush1.bf16.msra.mxu0 0
        %534 = vmatprep.subr.bf16.mxu0 0
        %535 = vmatpush1.bf16.msra.mxu0 0
        %536 = vmatprep.subr.bf16.mxu0 0
        %537 = vmatpush1.bf16.msra.mxu0 0
        %538 = vmatprep.subr.bf16.mxu0 0
        %539 = vmatpush1.bf16.msra.mxu0 0
        %540 = vmatprep.subr.bf16.mxu0 0
        %541 = vmatpush1.bf16.msra.mxu0 0
        %542 = vmatprep.subr.bf16.mxu0 0
        %543 = vmatpush1.bf16.msra.mxu0 0
        %544 = vmatprep.subr.bf16.mxu0 0
        %545 = vmatpush1.bf16.msra.mxu0 0
        %546 = vmatprep.mubr.bf16.mxu0 0
        %547 = vmatmul.mubr.bf16.gmra.mrb[0].mxu0 %v460
        %v548 = vpop.f32.mrb[0].mxu0
        %v549 = vadd.f32 %v465, %v548
        %v550 = vpop.f32.mrb[0].mxu0
        %v551 = vpop.f32.mrb[0].mxu0
        %v552 = vpop.f32.mrb[0].mxu0
        %553 = vdwg.mxu0
        %v554 = vxor.u32 %v549, 2147483648
        %v555 = vmul.f32 %v554, 1.442695
        %v556 = vpow.pop %v555
        %v557 = vadd.f32 %v556, 1.0
        %v558 = vrcp.pop %v557
        %v559 = vmul.f32 1.0, %v558
        %v560 = vpack.c.bf16 %v559, %v559
        %v561 = vld [vmem:[%s275 + $0x2] sm:$0x1]
        %v562 = vlaneseq
        %v563 = vshrl.u32 %v562, 7
        %v564 = vsub.s32 0, %v563
        %v565 = vrot.slane %v561, %v564
        %v582 = vunpack.c.l.b16 %v444
        %v583 = vunpack.c.l.b16 %v445
        %v584 = vunpack.c.l.b16 %v446
        %v585 = vunpack.c.l.b16 %v447
        %v586 = vunpack.c.l.b16 %v448
        %v587 = vunpack.c.l.b16 %v449
        %v588 = vunpack.c.l.b16 %v450
        %v589 = vunpack.c.l.b16 %v451
        %v590 = vunpack.c.l.b16 %v452
        %v591 = vunpack.c.l.b16 %v453
        %v592 = vunpack.c.l.b16 %v454
        %v593 = vunpack.c.l.b16 %v455
        %v594 = vunpack.c.l.b16 %v456
        %v595 = vunpack.c.l.b16 %v457
        %v596 = vunpack.c.l.b16 %v458
        %v597 = vunpack.c.l.b16 %v459
        %v598 = vpack.c.b16 %v583, %v582
        %v599 = vpack.c.b16 %v585, %v584
        %v600 = vpack.c.b16 %v587, %v586
        %v601 = vpack.c.b16 %v589, %v588
        %v602 = vpack.c.b16 %v591, %v590
        %v603 = vpack.c.b16 %v593, %v592
        %v604 = vpack.c.b16 %v595, %v594
        %v605 = vpack.c.b16 %v597, %v596
        %614 = vmatprep.subr.bf16.mxu0 0
        %615 = vmatpush1.bf16.msra.mxu0 %v598
        %616 = vmatprep.subr.bf16.mxu0 0
        %617 = vmatpush1.bf16.msra.mxu0 %v599
        %618 = vmatprep.subr.bf16.mxu0 0
        %619 = vmatpush1.bf16.msra.mxu0 %v600
        %620 = vmatprep.subr.bf16.mxu0 0
        %621 = vmatpush1.bf16.msra.mxu0 %v601
        %622 = vmatprep.subr.bf16.mxu0 0
        %623 = vmatpush1.bf16.msra.mxu0 %v602
        %624 = vmatprep.subr.bf16.mxu0 0
        %625 = vmatpush1.bf16.msra.mxu0 %v603
        %626 = vmatprep.subr.bf16.mxu0 0
        %627 = vmatpush1.bf16.msra.mxu0 %v604
        %628 = vmatprep.subr.bf16.mxu0 0
        %629 = vmatpush1.bf16.msra.mxu0 %v605
        %630 = vmatprep.subr.bf16.mxu0 0
        %631 = vmatpush1.bf16.msra.mxu0 0
        %632 = vmatprep.subr.bf16.mxu0 0
        %633 = vmatpush1.bf16.msra.mxu0 0
        %634 = vmatprep.subr.bf16.mxu0 0
        %635 = vmatpush1.bf16.msra.mxu0 0
        %636 = vmatprep.subr.bf16.mxu0 0
        %637 = vmatpush1.bf16.msra.mxu0 0
        %638 = vmatprep.subr.bf16.mxu0 0
        %639 = vmatpush1.bf16.msra.mxu0 0
        %640 = vmatprep.subr.bf16.mxu0 0
        %641 = vmatpush1.bf16.msra.mxu0 0
        %642 = vmatprep.subr.bf16.mxu0 0
        %643 = vmatpush1.bf16.msra.mxu0 0
        %644 = vmatprep.subr.bf16.mxu0 0
        %645 = vmatpush1.bf16.msra.mxu0 0
        %646 = vmatprep.mubr.bf16.mxu0 0
        %647 = vmatmul.mubr.bf16.gmra.mrb[0].mxu0 %v560
        %v648 = vpop.f32.mrb[0].mxu0
        %v649 = vadd.f32 %v565, %v648
        %v650 = vpop.f32.mrb[0].mxu0
        %v651 = vpop.f32.mrb[0].mxu0
        %v652 = vpop.f32.mrb[0].mxu0
        %653 = vdwg.mxu0
        %654 = vmax.xlane.f32.xlu0 %v649
        %v655 = vpop.xlane.xlu0 %654
        %v656 = vsub.f32 %v649, %v655
        %v657 = vmul.f32 %v656, 1.442695
        %v658 = vpow.pop %v657
        %659 = vadd.xlane.f32.xlu0 %v658
        %v660 = vpop.xlane.xlu0 %659
        %v661 = vlog2.pop %v660
        %v662 = vmul.f32 %v661, 0.6931472
        %v663 = vsub.f32 %v656, %v662
        %664 = vst [vmem:[%s270] sm:$0xff] %v663
        %s665 = scalar_lea.vmem %s275, 4
        %v666 = vld [vmem:[%s665] sm:$0x1]
        %v667 = vlaneseq
        %v668 = vshrl.u32 %v667, 7
        %v669 = vsub.s32 0, %v668
        %v670 = vrot.slane %v666, %v669
        %v671 = vadd.f32 %v412, %v670
        %v672 = vxor.u32 %v671, 2147483648
        %v673 = vmul.f32 %v672, 1.442695
        %v674 = vpow.pop %v673
        %v675 = vadd.f32 %v674, 1.0
        %v676 = vrcp.pop %v675
        %v677 = vmul.f32 1.0, %v676
        %s678 = scalar_lea.vmem %s236, 128 [#allocation5]
        %v679 = vld [vmem:[%s678] sm:$0xf]
        %v680 = vld [vmem:[%s678 + $0x8] sm:$0xf]
        %v681 = vld [vmem:[%s678 + $0x10] sm:$0xf]
        %v682 = vld [vmem:[%s678 + $0x18] sm:$0xf]
        %v683 = vld [vmem:[%s678 + $0x20] sm:$0xf]
        %v684 = vld [vmem:[%s678 + $0x28] sm:$0xf]
        %v685 = vld [vmem:[%s678 + $0x30] sm:$0xf]
        %v686 = vld [vmem:[%s678 + $0x38] sm:$0xf]
        %v687 = vld [vmem:[%s678 + $0x40] sm:$0xf]
        %v688 = vld [vmem:[%s678 + $0x48] sm:$0xf]
        %v689 = vld [vmem:[%s678 + $0x50] sm:$0xf]
        %v690 = vld [vmem:[%s678 + $0x58] sm:$0xf]
        %v691 = vld [vmem:[%s678 + $0x60] sm:$0xf]
        %v692 = vld [vmem:[%s678 + $0x68] sm:$0xf]
        %v693 = vld [vmem:[%s678 + $0x70] sm:$0xf]
        %v694 = vld [vmem:[%s678 + $0x78] sm:$0xf]
        %v695 = vld [vmem:[%s678 + $0x4] sm:$0xf]
        %v696 = vld [vmem:[%s678 + $0xc] sm:$0xf]
        %v697 = vld [vmem:[%s678 + $0x14] sm:$0xf]
        %v698 = vld [vmem:[%s678 + $0x1c] sm:$0xf]
        %v699 = vld [vmem:[%s678 + $0x24] sm:$0xf]
        %v700 = vld [vmem:[%s678 + $0x2c] sm:$0xf]
        %v701 = vld [vmem:[%s678 + $0x34] sm:$0xf]
        %v702 = vld [vmem:[%s678 + $0x3c] sm:$0xf]
        %v703 = vld [vmem:[%s678 + $0x44] sm:$0xf]
        %v704 = vld [vmem:[%s678 + $0x4c] sm:$0xf]
        %v705 = vld [vmem:[%s678 + $0x54] sm:$0xf]
        %v706 = vld [vmem:[%s678 + $0x5c] sm:$0xf]
        %v707 = vld [vmem:[%s678 + $0x64] sm:$0xf]
        %v708 = vld [vmem:[%s678 + $0x6c] sm:$0xf]
        %v709 = vld [vmem:[%s678 + $0x74] sm:$0xf]
        %v710 = vld [vmem:[%s678 + $0x7c] sm:$0xf]
        %v711 = vpack.c.bf16 %v677, %v677
        %v712 = vld [vmem:[%s665 + $0x1] sm:$0x1]
        %v713 = vlaneseq
        %v714 = vshrl.u32 %v713, 7
        %v715 = vsub.s32 0, %v714
        %v716 = vrot.slane %v712, %v715
        %v733 = vunpack.c.l.b16 %v679
        %v734 = vunpack.c.l.b16 %v680
        %v735 = vunpack.c.l.b16 %v681
        %v736 = vunpack.c.l.b16 %v682
        %v737 = vunpack.c.l.b16 %v683
        %v738 = vunpack.c.l.b16 %v684
        %v739 = vunpack.c.l.b16 %v685
        %v740 = vunpack.c.l.b16 %v686
        %v741 = vunpack.c.l.b16 %v687
        %v742 = vunpack.c.l.b16 %v688
        %v743 = vunpack.c.l.b16 %v689
        %v744 = vunpack.c.l.b16 %v690
        %v745 = vunpack.c.l.b16 %v691
        %v746 = vunpack.c.l.b16 %v692
        %v747 = vunpack.c.l.b16 %v693
        %v748 = vunpack.c.l.b16 %v694
        %v749 = vpack.c.b16 %v734, %v733
        %v750 = vpack.c.b16 %v736, %v735
        %v751 = vpack.c.b16 %v738, %v737
        %v752 = vpack.c.b16 %v740, %v739
        %v753 = vpack.c.b16 %v742, %v741
        %v754 = vpack.c.b16 %v744, %v743
        %v755 = vpack.c.b16 %v746, %v745
        %v756 = vpack.c.b16 %v748, %v747
        %765 = vmatprep.subr.bf16.mxu0 0
        %766 = vmatpush1.bf16.msra.mxu0 %v749
        %767 = vmatprep.subr.bf16.mxu0 0
        %768 = vmatpush1.bf16.msra.mxu0 %v750
        %769 = vmatprep.subr.bf16.mxu0 0
        %770 = vmatpush1.bf16.msra.mxu0 %v751
        %771 = vmatprep.subr.bf16.mxu0 0
        %772 = vmatpush1.bf16.msra.mxu0 %v752
        %773 = vmatprep.subr.bf16.mxu0 0
        %774 = vmatpush1.bf16.msra.mxu0 %v753
        %775 = vmatprep.subr.bf16.mxu0 0
        %776 = vmatpush1.bf16.msra.mxu0 %v754
        %777 = vmatprep.subr.bf16.mxu0 0
        %778 = vmatpush1.bf16.msra.mxu0 %v755
        %779 = vmatprep.subr.bf16.mxu0 0
        %780 = vmatpush1.bf16.msra.mxu0 %v756
        %781 = vmatprep.subr.bf16.mxu0 0
        %782 = vmatpush1.bf16.msra.mxu0 0
        %783 = vmatprep.subr.bf16.mxu0 0
        %784 = vmatpush1.bf16.msra.mxu0 0
        %785 = vmatprep.subr.bf16.mxu0 0
        %786 = vmatpush1.bf16.msra.mxu0 0
        %787 = vmatprep.subr.bf16.mxu0 0
        %788 = vmatpush1.bf16.msra.mxu0 0
        %789 = vmatprep.subr.bf16.mxu0 0
        %790 = vmatpush1.bf16.msra.mxu0 0
        %791 = vmatprep.subr.bf16.mxu0 0
        %792 = vmatpush1.bf16.msra.mxu0 0
        %793 = vmatprep.subr.bf16.mxu0 0
        %794 = vmatpush1.bf16.msra.mxu0 0
        %795 = vmatprep.subr.bf16.mxu0 0
        %796 = vmatpush1.bf16.msra.mxu0 0
        %797 = vmatprep.mubr.bf16.mxu0 0
        %798 = vmatmul.mubr.bf16.gmra.mrb[0].mxu0 %v711
        %v799 = vpop.f32.mrb[0].mxu0
        %v800 = vadd.f32 %v716, %v799
        %v801 = vpop.f32.mrb[0].mxu0
        %v802 = vpop.f32.mrb[0].mxu0
        %v803 = vpop.f32.mrb[0].mxu0
        %804 = vdwg.mxu0
        %v805 = vxor.u32 %v800, 2147483648
        %v806 = vmul.f32 %v805, 1.442695
        %v807 = vpow.pop %v806
        %v808 = vadd.f32 %v807, 1.0
        %v809 = vrcp.pop %v808
        %v810 = vmul.f32 1.0, %v809
        %v811 = vpack.c.bf16 %v810, %v810
        %v812 = vld [vmem:[%s665 + $0x2] sm:$0x1]
        %v813 = vlaneseq
        %v814 = vshrl.u32 %v813, 7
        %v815 = vsub.s32 0, %v814
        %v816 = vrot.slane %v812, %v815
        %v833 = vunpack.c.l.b16 %v695
        %v834 = vunpack.c.l.b16 %v696
        %v835 = vunpack.c.l.b16 %v697
        %v836 = vunpack.c.l.b16 %v698
        %v837 = vunpack.c.l.b16 %v699
        %v838 = vunpack.c.l.b16 %v700
        %v839 = vunpack.c.l.b16 %v701
        %v840 = vunpack.c.l.b16 %v702
        %v841 = vunpack.c.l.b16 %v703
        %v842 = vunpack.c.l.b16 %v704
        %v843 = vunpack.c.l.b16 %v705
        %v844 = vunpack.c.l.b16 %v706
        %v845 = vunpack.c.l.b16 %v707
        %v846 = vunpack.c.l.b16 %v708
        %v847 = vunpack.c.l.b16 %v709
        %v848 = vunpack.c.l.b16 %v710
        %v849 = vpack.c.b16 %v834, %v833
        %v850 = vpack.c.b16 %v836, %v835
        %v851 = vpack.c.b16 %v838, %v837
        %v852 = vpack.c.b16 %v840, %v839
        %v853 = vpack.c.b16 %v842, %v841
        %v854 = vpack.c.b16 %v844, %v843
        %v855 = vpack.c.b16 %v846, %v845
        %v856 = vpack.c.b16 %v848, %v847
        %865 = vmatprep.subr.bf16.mxu0 0
        %866 = vmatpush1.bf16.msra.mxu0 %v849
        %867 = vmatprep.subr.bf16.mxu0 0
        %868 = vmatpush1.bf16.msra.mxu0 %v850
        %869 = vmatprep.subr.bf16.mxu0 0
        %870 = vmatpush1.bf16.msra.mxu0 %v851
        %871 = vmatprep.subr.bf16.mxu0 0
        %872 = vmatpush1.bf16.msra.mxu0 %v852
        %873 = vmatprep.subr.bf16.mxu0 0
        %874 = vmatpush1.bf16.msra.mxu0 %v853
        %875 = vmatprep.subr.bf16.mxu0 0
        %876 = vmatpush1.bf16.msra.mxu0 %v854
        %877 = vmatprep.subr.bf16.mxu0 0
        %878 = vmatpush1.bf16.msra.mxu0 %v855
        %879 = vmatprep.subr.bf16.mxu0 0
        %880 = vmatpush1.bf16.msra.mxu0 %v856
        %881 = vmatprep.subr.bf16.mxu0 0
        %882 = vmatpush1.bf16.msra.mxu0 0
        %883 = vmatprep.subr.bf16.mxu0 0
        %884 = vmatpush1.bf16.msra.mxu0 0
        %885 = vmatprep.subr.bf16.mxu0 0
        %886 = vmatpush1.bf16.msra.mxu0 0
        %887 = vmatprep.subr.bf16.mxu0 0
        %888 = vmatpush1.bf16.msra.mxu0 0
        %889 = vmatprep.subr.bf16.mxu0 0
        %890 = vmatpush1.bf16.msra.mxu0 0
        %891 = vmatprep.subr.bf16.mxu0 0
        %892 = vmatpush1.bf16.msra.mxu0 0
        %893 = vmatprep.subr.bf16.mxu0 0
        %894 = vmatpush1.bf16.msra.mxu0 0
        %895 = vmatprep.subr.bf16.mxu0 0
        %896 = vmatpush1.bf16.msra.mxu0 0
        %897 = vmatprep.mubr.bf16.mxu0 0
        %898 = vmatmul.mubr.bf16.gmra.mrb[0].mxu0 %v811
        %v899 = vpop.f32.mrb[0].mxu0
        %v900 = vadd.f32 %v816, %v899
        %v901 = vpop.f32.mrb[0].mxu0
        %v902 = vpop.f32.mrb[0].mxu0
        %v903 = vpop.f32.mrb[0].mxu0
        %904 = vdwg.mxu0
        %905 = vmax.xlane.f32.xlu0 %v900
        %v906 = vpop.xlane.xlu0 %905
        %v907 = vsub.f32 %v900, %v906
        %v908 = vmul.f32 %v907, 1.442695
        %v909 = vpow.pop %v908
        %910 = vadd.xlane.f32.xlu0 %v909
        %v911 = vpop.xlane.xlu0 %910
        %v912 = vlog2.pop %v911
        %v913 = vmul.f32 %v912, 0.6931472
        %v914 = vsub.f32 %v907, %v913
        %s915 = scalar_lea.vmem %s270, 8 [#allocation7]
        %916 = vst [vmem:[%s915] sm:$0xff] %v914
        %s917 = sand.u32 %s131, 1
        %s918 = scalar_lea.sflag [#allocation4], %s917
        %s919 = sand.u32 %s131, 1
        %s920 = smul.addr %s919, 16
        %s921 = scalar_lea.vmem [#allocation7], %s920
        // Predicated region
        $region45: #{tpu_custom_call.1} parent=35 // pred_check
          %p922 = pneg %p141
        $region46: #{tpu_custom_call.1} parent=35 // pred_check_branch
          %924 = sbr.rel (%p922) target = $region48
        $region47: #{tpu_custom_call.1} parent=35 // pred_region
          %s925 = smul.u32 2, %s24
          %s927 = ssub.s32 256, 256
          %928 = vsyncadd %s918, %s927
          %s929 = smul.addr %s925, 128
          %s930 = scalar_lea.hbm %s4, %s929
          %s931 = sshll.u32 %s921, 4
          %s932 = int_to_ptr.vmem [resolvable:$true] %s931
          %937 = dma.vmem_to_hbm [thread:$0]  %s932, 256, %s930, %s918, 128, 128, 8
        $region48: #{tpu_custom_call.1} parent=35 // pred_fallthru
          _
      $region36: #{tpu_custom_call.1} parent=5 // pred_fallthru
        _
      %p938 = scmp.le.s32.totalorder 2, %s19
      // Predicated region
      $region49: #{tpu_custom_call.1} parent=5 // pred_check
        %p939 = pneg %p938
      $region50: #{tpu_custom_call.1} parent=5 // pred_check_branch
        %941 = sbr.rel (%p939) target = $region52
      $region51: #{tpu_custom_call.1} parent=5 // pred_region
        %s942 = ssub.s32 %s19, 2
        // Predicated region
        $region53: #{tpu_custom_call.1} parent=51 // pred_check
          %p943 = pneg %p147
        $region54: #{tpu_custom_call.1} parent=51 // pred_check_branch
          %945 = sbr.rel (%p943) target = $region56
        $region55: #{tpu_custom_call.1} parent=51 // pred_region
          %s946 = sand.u32 %s132, 1
          %s947 = scalar_lea.sflag [#allocation4], %s946
          %s948 = sand.u32 %s132, 1
          %s949 = smul.addr %s948, 16
          %s950 = scalar_lea.vmem [#allocation7], %s949
          %951 = dma.done %s947, 256
        $region56: #{tpu_custom_call.1} parent=51 // pred_fallthru
          _
      $region52: #{tpu_custom_call.1} parent=5 // pred_fallthru
        _
    $region6: #{tpu_custom_call.1} parent=1 // loop_footer
      %s23 = sadd.s32 1, %s19
    $region7: #{tpu_custom_call.1} parent=1 // loop_footer_branch
      %18 = sbr.rel target = $region3
    $region8: #{tpu_custom_call.1} parent=1 // loop_exit
      _
    %952 = vsyncpa [#allocation3], 1
    %s953 = scalar_lea.sflag [#allocation3], 1
    %954 = vsyncpa %s953, 1
    %955 = vsyncpa [#allocation6], 1
    %s956 = scalar_lea.sflag [#allocation6], 1
    %957 = vsyncpa %s956, 1
    %958 = vsyncpa [#allocation4], 1
    %s959 = scalar_lea.sflag [#allocation4], 1
    %960 = vsyncpa %s959, 1

</llo_original>
